<compile_context>
chip_gen: v7x
topology: tpu7x:2x2x1
jax: 0.10.0
libtpu: 0.0.40
codegen_flags: <defaults>
</compile_context>

<pallas_src>
import functools
import math

import jax
import jax.numpy as jnp
from jax.experimental import pallas as pl
from jax.experimental.pallas import tpu as pltpu


def _temporal_block_kernel(x_ref, w1_ref, b1_ref, w2_ref, b2_ref, *rest,
                           dilation, seq_len, kernel_size, has_ds, mxu_dtype):
    """One fused TemporalBlock on a lane-dense (C, tile_lanes) tile.

    Tile lanes hold whole samples (tile_lanes % seq_len == 0), so the
    within-sample time index of lane l is simply l % seq_len.
    """
    if has_ds:
        wds_ref, bds_ref, out_ref = rest
    else:
        (out_ref,) = rest

    lanes = x_ref.shape[-1]
    # Within-sample time index; the tile offset is a multiple of seq_len so it
    # drops out of the modulo.  Used to implement the causal left padding and
    # to stop leakage across folded per-sample boundaries.
    pos = jax.lax.broadcasted_iota(jnp.int32, (1, lanes), 1) % seq_len

    def stacked_taps(v):
        # v: (C, lanes) f32.  Returns (K*C, lanes) in mxu_dtype; row slab j
        # holds v shifted right by (K-1-j)*dilation with causal zero fill.
        parts = []
        for j in range(kernel_size):
            shift = (kernel_size - 1 - j) * dilation
            if shift == 0:
                parts.append(v)
            elif shift >= seq_len:
                # This tap only ever reads the causal left-pad zeros.
                parts.append(jnp.zeros_like(v))
            else:
                rolled = pltpu.roll(v, shift, axis=1)     # XLU lane rotation
                # Mask zeroes every lane whose within-sample index < shift:
                # handles both the tile-start wraparound and sample boundaries.
                parts.append(jnp.where(pos >= shift, rolled, 0.0))
        return jnp.concatenate(parts, axis=0).astype(mxu_dtype)

    x_f = jnp.asarray(x_ref[...], jnp.float32)

    # conv1 -> chomp -> ReLU   (dropout = eval-mode identity)
    y1 = jnp.dot(w1_ref[...], stacked_taps(x_f),
                 preferred_element_type=jnp.float32)
    y1 = jnp.maximum(y1 + b1_ref[...], 0.0)

    # conv2 -> chomp -> ReLU
    y2 = jnp.dot(w2_ref[...], stacked_taps(y1),
                 preferred_element_type=jnp.float32)
    y2 = jnp.maximum(y2 + b2_ref[...], 0.0)

    # Residual branch: re-read x_ref here (don't keep x live across both
    # convs); identity or fused 1x1 downsample conv.
    if has_ds:
        res = jnp.dot(wds_ref[...], x_ref[...].astype(mxu_dtype),
                      preferred_element_type=jnp.float32) + bds_ref[...]
    else:
        res = x_ref[...].astype(jnp.float32)

    out_ref[...] = jnp.maximum(y2 + res, 0.0).astype(out_ref.dtype)


def temporal_block(h, blk, *, dilation, seq_len, samples_per_tile,
                   mxu_dtype, act_dtype):
    """One TemporalBlock as a single lane-tiled pallas_call.

    h:   (C_in, total_lanes) activations (act_dtype), batch folded into lanes,
         total_lanes a multiple of samples_per_tile * seq_len.
    blk: prepared weights (see prepare_params).
    """
    c_in, total_lanes = h.shape
    c_out = blk["w1"].shape[0]
    kernel_size = blk["w1"].shape[1] // c_in
    tile_lanes = samples_per_tile * seq_len
    num_tiles = total_lanes // tile_lanes
    has_ds = "w_ds" in blk

    args = [h, blk["w1"], blk["b1"], blk["w2"], blk["b2"]]
    in_specs = [
        pl.BlockSpec((c_in, tile_lanes), lambda i: (0, i)),       # activations
        pl.BlockSpec(blk["w1"].shape, lambda i: (0, 0)),          # w1 (Cout,K*Cin)
        pl.BlockSpec((c_out, 1), lambda i: (0, 0)),               # b1
        pl.BlockSpec(blk["w2"].shape, lambda i: (0, 0)),          # w2 (Cout,K*Cout)
        pl.BlockSpec((c_out, 1), lambda i: (0, 0)),               # b2
    ]
    if has_ds:
        args += [blk["w_ds"], blk["b_ds"]]
        in_specs += [
            pl.BlockSpec((c_out, c_in), lambda i: (0, 0)),        # 1x1 downsample
            pl.BlockSpec((c_out, 1), lambda i: (0, 0)),
        ]

    kernel = functools.partial(
        _temporal_block_kernel,
        dilation=dilation, seq_len=seq_len, kernel_size=kernel_size,
        has_ds=has_ds, mxu_dtype=mxu_dtype)

    return pl.pallas_call(
        kernel,
        out_shape=jax.ShapeDtypeStruct((c_out, total_lanes), act_dtype),
        grid=(num_tiles,),
        in_specs=in_specs,
        out_specs=pl.BlockSpec((c_out, tile_lanes), lambda i: (0, i)),
        compiler_params=pltpu.CompilerParams(
            dimension_semantics=("parallel",),
            vmem_limit_bytes=48 * 1024 * 1024),   # headroom under v7x's 64 MiB
    )(*args)


def prepare_params(params, *, mxu_dtype=jnp.bfloat16):
    """One-time weight preprocessing: tap-fold to (C_out, K*C_in) + MXU cast.

    Tap slab j (columns [j*C_in, (j+1)*C_in)) multiplies the input shifted by
    (K-1-j)*dilation, matching the stacking order in the kernel.
    """
    out = []
    for p in params:
        c_out, c_in, k = p["w1"].shape

        def _flat(w):
            co, ci, kk = w.shape
            return jnp.transpose(w, (0, 2, 1)).reshape(co, kk * ci).astype(mxu_dtype)

        blk = {
            "w1": _flat(p["w1"]),
            "b1": p["b1"].reshape(c_out, 1).astype(jnp.float32),
            "w2": _flat(p["w2"]),
            "b2": p["b2"].reshape(c_out, 1).astype(jnp.float32),
        }
        if p["w_ds"] is not None:
            blk["w_ds"] = p["w_ds"][:, :, 0].astype(mxu_dtype)
            blk["b_ds"] = p["b_ds"].reshape(c_out, 1).astype(jnp.float32)
        out.append(blk)
    return out


def temporal_conv_net(x, prepared, *, act_dtype=jnp.bfloat16,
                      mxu_dtype=jnp.bfloat16, target_tile_lanes=2048):
    """TemporalConvNet forward. x: (N, C_in, L) f32 -> (N, C_last, L) f32."""
    n, c_in, seq_len = x.shape

    # Lane tiling: tiles are whole samples, and lane counts are multiples of
    # 128 (pad the batch with zero samples) so stores are unmasked vst.
    samples_align = 128 // math.gcd(seq_len, 128)
    if seq_len * samples_align <= target_tile_lanes:
        samples_per_tile = (target_tile_lanes // seq_len // samples_align) * samples_align
    else:
        samples_per_tile = samples_align
    n_aligned = -(-n // samples_align) * samples_align
    samples_per_tile = min(samples_per_tile, n_aligned)
    n_total = -(-n // samples_per_tile) * samples_per_tile

    if n_total > n:
        x = jnp.pad(x, ((0, n_total - n), (0, 0), (0, 0)))

    # Fold batch into lanes once for the whole network: (N,C,L) -> (C, N*L).
    h = jnp.transpose(x, (1, 0, 2)).reshape(c_in, n_total * seq_len).astype(act_dtype)

    for i, blk in enumerate(prepared):
        h = temporal_block(h, blk, dilation=2 ** i, seq_len=seq_len,
                           samples_per_tile=samples_per_tile,
                           mxu_dtype=mxu_dtype, act_dtype=act_dtype)

    c_last = h.shape[0]
    out = jnp.transpose(h.reshape(c_last, n_total, seq_len), (1, 0, 2))
    return out[:n].astype(jnp.float32)


def init_params(key, num_inputs, num_channels, kernel_size):
    """Parameters mirroring TemporalBlock.init_weights.

    Conv weights ~ N(0, 0.01); biases use PyTorch Conv1d's default
    U(-1/sqrt(fan_in), 1/sqrt(fan_in)) (init_weights does not touch biases).
    weight_norm is folded: these are the effective forward weights.
    """
    params = []
    in_ch = num_inputs
    for i, out_ch in enumerate(num_channels):
        keys = jax.random.split(jax.random.fold_in(key, i), 6)

        def _bias(k, fan_in, out_ch=out_ch):
            bound = 1.0 / (fan_in ** 0.5)
            return jax.random.uniform(k, (out_ch,), jnp.float32, -bound, bound)

        p = {
            "w1": 0.01 * jax.random.normal(keys[0], (out_ch, in_ch, kernel_size), jnp.float32),
            "b1": _bias(keys[1], in_ch * kernel_size),
            "w2": 0.01 * jax.random.normal(keys[2], (out_ch, out_ch, kernel_size), jnp.float32),
            "b2": _bias(keys[3], out_ch * kernel_size),
        }
        if in_ch != out_ch:
            p["w_ds"] = 0.01 * jax.random.normal(keys[4], (out_ch, in_ch, 1), jnp.float32)
            p["b_ds"] = _bias(keys[5], in_ch)
        else:
            p["w_ds"] = None
            p["b_ds"] = None
        params.append(p)
        in_ch = out_ch
    return params


# ----------------------- pure-JAX reference (f32) -----------------------
def _reference_causal_conv(x, w, b, dilation):
    n, c_in, seq_len = x.shape
    c_out, _, k = w.shape
    pad = (k - 1) * dilation
    xp = jnp.pad(x, ((0, 0), (0, 0), (pad, 0)))
    y = jnp.zeros((n, c_out, seq_len), jnp.float32)
    for j in range(k):
        y = y + jnp.einsum("oc,ncl->nol", w[:, :, j],
                           xp[:, :, j * dilation:j * dilation + seq_len])
    return y + b[None, :, None]


def _reference_tcn(x, params):
    h = x
    for i, p in enumerate(params):
        d = 2 ** i
        y1 = jax.nn.relu(_reference_causal_conv(h, p["w1"], p["b1"], d))
        y2 = jax.nn.relu(_reference_causal_conv(y1, p["w2"], p["b2"], d))
        res = h if p["w_ds"] is None else _reference_causal_conv(h, p["w_ds"], p["b_ds"], 1)
        h = jax.nn.relu(y2 + res)
    return h


if __name__ == "__main__":
    key = jax.random.PRNGKey(0)

    # (batch, num_inputs, seq_len) input, Conv1d layout.
    batch, num_inputs, seq_len = 2, 4, 16
    num_channels = [8, 8, 16]   # middle level exercises the identity-residual path
    kernel_size = 2

    params = init_params(key, num_inputs, num_channels, kernel_size)
    prepared = prepare_params(params)           # one-time weight preprocessing
    x = jax.random.normal(jax.random.fold_in(key, 999),
                          (batch, num_inputs, seq_len), jnp.float32)

    fwd = jax.jit(temporal_conv_net)
    out = jax.block_until_ready(fwd(x, prepared))
    assert out.shape == (batch, num_channels[-1], seq_len)

    # Sanity check vs the pure-JAX f32 reference (loose tol: bf16 MXU inputs
    # and bf16 inter-block activations diverge slightly from f32 Conv1d).
    ref = _reference_tcn(x, params)
    max_err = float(jnp.max(jnp.abs(out - ref)))
    assert jnp.allclose(out, ref, rtol=1e-2, atol=1e-2), f"max abs err {max_err}"

    print("KERNEL_OK")
</pallas_src>

<mosaic_0001>
module attributes {stable_mosaic.version = 11 : i64} {
  func.func @_temporal_block_kernel(%arg0: i32, %arg1: memref<8x128xbf16, #tpu.memory_space<vmem>>, %arg2: memref<8x16xbf16, #tpu.memory_space<vmem>>, %arg3: memref<8x1xf32, #tpu.memory_space<vmem>>, %arg4: memref<8x16xbf16, #tpu.memory_space<vmem>>, %arg5: memref<8x1xf32, #tpu.memory_space<vmem>>, %arg6: memref<8x128xbf16, #tpu.memory_space<vmem>>) attributes {dimension_semantics = [#tpu.dimension_semantics<parallel>], iteration_bounds = array<i64: 1>, scalar_prefetch = 0 : i64, scratch_operands = 0 : i64, tpu.core_type = #tpu.core_type<tc>, window_params = [{transform_indices = @transform_0, window_bounds = array<i64: 8, 128>}, {pipeline_mode = #tpu.pipeline_mode<synchronous>, transform_indices = @transform_1, window_bounds = array<i64: 8, 16>}, {pipeline_mode = #tpu.pipeline_mode<synchronous>, transform_indices = @transform_2, window_bounds = array<i64: 8, 1>}, {pipeline_mode = #tpu.pipeline_mode<synchronous>, transform_indices = @transform_3, window_bounds = array<i64: 8, 16>}, {pipeline_mode = #tpu.pipeline_mode<synchronous>, transform_indices = @transform_4, window_bounds = array<i64: 8, 1>}, {transform_indices = @transform_5, window_bounds = array<i64: 8, 128>}]} {
    %0 = tpu.iota {dimensions = array<i32: 1>} : vector<1x128xi32>
    %c16_i32 = arith.constant 16 : i32
    %c0_i32 = arith.constant 0 : i32
    %1 = arith.cmpi eq, %c16_i32, %c0_i32 : i32
    %c1_i32 = arith.constant 1 : i32
    %2 = arith.select %1, %c1_i32, %c16_i32 : i32
    %3 = vector.broadcast %2 : i32 to vector<1x128xi32>
    %4 = arith.remsi %0, %3 : vector<1x128xi32>
    %c0_i32_0 = arith.constant 0 : i32
    %5 = vector.broadcast %c0_i32_0 : i32 to vector<1x128xi32>
    %6 = arith.cmpi ne, %4, %5 : vector<1x128xi32>
    %c0_i32_1 = arith.constant 0 : i32
    %7 = vector.broadcast %c0_i32_1 : i32 to vector<1x128xi32>
    %8 = arith.cmpi slt, %4, %7 : vector<1x128xi32>
    %c0_i32_2 = arith.constant 0 : i32
    %9 = arith.cmpi slt, %2, %c0_i32_2 : i32
    %10 = vector.broadcast %9 : i1 to vector<1x128xi1>
    %11 = vector.broadcast %10 : vector<1x128xi1> to vector<1x128xi1>
    %12 = arith.xori %8, %11 : vector<1x128xi1>
    %13 = arith.andi %12, %6 : vector<1x128xi1>
    %14 = vector.broadcast %2 : i32 to vector<1x128xi32>
    %15 = arith.addi %4, %14 : vector<1x128xi32>
    %16 = arith.select %13, %15, %4 : vector<1x128xi1>, vector<1x128xi32>
    %c0 = arith.constant 0 : index
    %c0_3 = arith.constant 0 : index
    %17 = vector.load %arg1[%c0, %c0_3] : memref<8x128xbf16, #tpu.memory_space<vmem>>, vector<8x128xbf16>
    %18 = arith.extf %17 : vector<8x128xbf16> to vector<8x128xf32>
    %c0_4 = arith.constant 0 : index
    %c0_5 = arith.constant 0 : index
    %19 = vector.load %arg2[%c0_4, %c0_5] : memref<8x16xbf16, #tpu.memory_space<vmem>>, vector<8x16xbf16>
    %c2_i32 = arith.constant 2 : i32
    %20 = tpu.dynamic_rotate %18 by %c2_i32 dim 1 : vector<8x128xf32>, i32 -> vector<8x128xf32>
    %c2_i32_6 = arith.constant 2 : i32
    %21 = vector.broadcast %c2_i32_6 : i32 to vector<1x128xi32>
    %22 = arith.cmpi sge, %16, %21 : vector<1x128xi32>
    %cst = arith.constant 0.000000e+00 : f32
    %23 = vector.shape_cast %22 : vector<1x128xi1> to vector<1x128xi1>
    %24 = vector.broadcast %23 : vector<1x128xi1> to vector<8x128xi1>
    %25 = vector.broadcast %cst : f32 to vector<8x128xf32>
    %26 = arith.select %24, %20, %25 : vector<8x128xi1>, vector<8x128xf32>
    %27 = tpu.concatenate %26, %18 in 0 : vector<8x128xf32>, vector<8x128xf32> -> vector<16x128xf32>
    %28 = arith.truncf %27 : vector<16x128xf32> to vector<16x128xbf16>
    %cst_7 = arith.constant dense<0.000000e+00> : vector<8x128xf32>
    %29 = tpu.matmul %19, %28, %cst_7 {dimension_numbers = #tpu.dot_dimension_numbers<[1], [0], [0], [1], [0, 0, 1, 1], [], []>} : vector<8x16xbf16>, vector<16x128xbf16>, vector<8x128xf32> -> vector<8x128xf32>
    %c0_8 = arith.constant 0 : index
    %c0_9 = arith.constant 0 : index
    %30 = vector.load %arg3[%c0_8, %c0_9] : memref<8x1xf32, #tpu.memory_space<vmem>>, vector<8x1xf32>
    %31 = vector.broadcast %30 : vector<8x1xf32> to vector<8x128xf32>
    %32 = arith.addf %29, %31 : vector<8x128xf32>
    %cst_10 = arith.constant 0.000000e+00 : f32
    %33 = vector.broadcast %cst_10 : f32 to vector<8x128xf32>
    %34 = arith.maximumf %32, %33 : vector<8x128xf32>
    %c0_11 = arith.constant 0 : index
    %c0_12 = arith.constant 0 : index
    %35 = vector.load %arg4[%c0_11, %c0_12] : memref<8x16xbf16, #tpu.memory_space<vmem>>, vector<8x16xbf16>
    %c2_i32_13 = arith.constant 2 : i32
    %36 = tpu.dynamic_rotate %34 by %c2_i32_13 dim 1 : vector<8x128xf32>, i32 -> vector<8x128xf32>
    %c2_i32_14 = arith.constant 2 : i32
    %37 = vector.broadcast %c2_i32_14 : i32 to vector<1x128xi32>
    %38 = arith.cmpi sge, %16, %37 : vector<1x128xi32>
    %cst_15 = arith.constant 0.000000e+00 : f32
    %39 = vector.shape_cast %38 : vector<1x128xi1> to vector<1x128xi1>
    %40 = vector.broadcast %39 : vector<1x128xi1> to vector<8x128xi1>
    %41 = vector.broadcast %cst_15 : f32 to vector<8x128xf32>
    %42 = arith.select %40, %36, %41 : vector<8x128xi1>, vector<8x128xf32>
    %43 = tpu.concatenate %42, %34 in 0 : vector<8x128xf32>, vector<8x128xf32> -> vector<16x128xf32>
    %44 = arith.truncf %43 : vector<16x128xf32> to vector<16x128xbf16>
    %cst_16 = arith.constant dense<0.000000e+00> : vector<8x128xf32>
    %45 = tpu.matmul %35, %44, %cst_16 {dimension_numbers = #tpu.dot_dimension_numbers<[1], [0], [0], [1], [0, 0, 1, 1], [], []>} : vector<8x16xbf16>, vector<16x128xbf16>, vector<8x128xf32> -> vector<8x128xf32>
    %c0_17 = arith.constant 0 : index
    %c0_18 = arith.constant 0 : index
    %46 = vector.load %arg5[%c0_17, %c0_18] : memref<8x1xf32, #tpu.memory_space<vmem>>, vector<8x1xf32>
    %47 = vector.broadcast %46 : vector<8x1xf32> to vector<8x128xf32>
    %48 = arith.addf %45, %47 : vector<8x128xf32>
    %cst_19 = arith.constant 0.000000e+00 : f32
    %49 = vector.broadcast %cst_19 : f32 to vector<8x128xf32>
    %50 = arith.maximumf %48, %49 : vector<8x128xf32>
    %c0_20 = arith.constant 0 : index
    %c0_21 = arith.constant 0 : index
    %51 = vector.load %arg1[%c0_20, %c0_21] : memref<8x128xbf16, #tpu.memory_space<vmem>>, vector<8x128xbf16>
    %52 = arith.extf %51 : vector<8x128xbf16> to vector<8x128xf32>
    %53 = arith.addf %50, %52 : vector<8x128xf32>
    %cst_22 = arith.constant 0.000000e+00 : f32
    %54 = vector.broadcast %cst_22 : f32 to vector<8x128xf32>
    %55 = arith.maximumf %53, %54 : vector<8x128xf32>
    %56 = arith.truncf %55 : vector<8x128xf32> to vector<8x128xbf16>
    %c0_23 = arith.constant 0 : index
    %c0_24 = arith.constant 0 : index
    %57 = vector.load %arg6[%c0_23, %c0_24] : memref<8x128xbf16, #tpu.memory_space<vmem>>, vector<8x128xbf16>
    tpu.vector_store %arg6[%c0_23, %c0_24], %56 {strides = array<i32>} : memref<8x128xbf16, #tpu.memory_space<vmem>>, vector<8x128xbf16>,
    return
  }
  func.func @transform_0(%arg0: i32) -> (i32, i32) {
    %c0_i32 = arith.constant 0 : i32
    %c0_i32_0 = arith.constant 0 : i32
    return %c0_i32, %arg0 : i32, i32
  }
  func.func @transform_1(%arg0: i32) -> (i32, i32) {
    %c0_i32 = arith.constant 0 : i32
    %c0_i32_0 = arith.constant 0 : i32
    %c0_i32_1 = arith.constant 0 : i32
    return %c0_i32, %c0_i32_0 : i32, i32
  }
  func.func @transform_2(%arg0: i32) -> (i32, i32) {
    %c0_i32 = arith.constant 0 : i32
    %c0_i32_0 = arith.constant 0 : i32
    %c0_i32_1 = arith.constant 0 : i32
    return %c0_i32, %c0_i32_0 : i32, i32
  }
  func.func @transform_3(%arg0: i32) -> (i32, i32) {
    %c0_i32 = arith.constant 0 : i32
    %c0_i32_0 = arith.constant 0 : i32
    %c0_i32_1 = arith.constant 0 : i32
    return %c0_i32, %c0_i32_0 : i32, i32
  }
  func.func @transform_4(%arg0: i32) -> (i32, i32) {
    %c0_i32 = arith.constant 0 : i32
    %c0_i32_0 = arith.constant 0 : i32
    %c0_i32_1 = arith.constant 0 : i32
    return %c0_i32, %c0_i32_0 : i32, i32
  }
  func.func @transform_5(%arg0: i32) -> (i32, i32) {
    %c0_i32 = arith.constant 0 : i32
    %c0_i32_0 = arith.constant 0 : i32
    return %c0_i32, %arg0 : i32, i32
  }
}

module attributes {stable_mosaic.version = 11 : i64} {
  func.func @_temporal_block_kernel(%arg0: i32, %arg1: memref<4x128xbf16, #tpu.memory_space<vmem>>, %arg2: memref<8x8xbf16, #tpu.memory_space<vmem>>, %arg3: memref<8x1xf32, #tpu.memory_space<vmem>>, %arg4: memref<8x16xbf16, #tpu.memory_space<vmem>>, %arg5: memref<8x1xf32, #tpu.memory_space<vmem>>, %arg6: memref<8x4xbf16, #tpu.memory_space<vmem>>, %arg7: memref<8x1xf32, #tpu.memory_space<vmem>>, %arg8: memref<8x128xbf16, #tpu.memory_space<vmem>>) attributes {dimension_semantics = [#tpu.dimension_semantics<parallel>], iteration_bounds = array<i64: 1>, scalar_prefetch = 0 : i64, scratch_operands = 0 : i64, tpu.core_type = #tpu.core_type<tc>, window_params = [{transform_indices = @transform_0, window_bounds = array<i64: 4, 128>}, {pipeline_mode = #tpu.pipeline_mode<synchronous>, transform_indices = @transform_1, window_bounds = array<i64: 8, 8>}, {pipeline_mode = #tpu.pipeline_mode<synchronous>, transform_indices = @transform_2, window_bounds = array<i64: 8, 1>}, {pipeline_mode = #tpu.pipeline_mode<synchronous>, transform_indices = @transform_3, window_bounds = array<i64: 8, 16>}, {pipeline_mode = #tpu.pipeline_mode<synchronous>, transform_indices = @transform_4, window_bounds = array<i64: 8, 1>}, {pipeline_mode = #tpu.pipeline_mode<synchronous>, transform_indices = @transform_5, window_bounds = array<i64: 8, 4>}, {pipeline_mode = #tpu.pipeline_mode<synchronous>, transform_indices = @transform_6, window_bounds = array<i64: 8, 1>}, {transform_indices = @transform_7, window_bounds = array<i64: 8, 128>}]} {
    %0 = tpu.iota {dimensions = array<i32: 1>} : vector<1x128xi32>
    %c16_i32 = arith.constant 16 : i32
    %c0_i32 = arith.constant 0 : i32
    %1 = arith.cmpi eq, %c16_i32, %c0_i32 : i32
    %c1_i32 = arith.constant 1 : i32
    %2 = arith.select %1, %c1_i32, %c16_i32 : i32
    %3 = vector.broadcast %2 : i32 to vector<1x128xi32>
    %4 = arith.remsi %0, %3 : vector<1x128xi32>
    %c0_i32_0 = arith.constant 0 : i32
    %5 = vector.broadcast %c0_i32_0 : i32 to vector<1x128xi32>
    %6 = arith.cmpi ne, %4, %5 : vector<1x128xi32>
    %c0_i32_1 = arith.constant 0 : i32
    %7 = vector.broadcast %c0_i32_1 : i32 to vector<1x128xi32>
    %8 = arith.cmpi slt, %4, %7 : vector<1x128xi32>
    %c0_i32_2 = arith.constant 0 : i32
    %9 = arith.cmpi slt, %2, %c0_i32_2 : i32
    %10 = vector.broadcast %9 : i1 to vector<1x128xi1>
    %11 = vector.broadcast %10 : vector<1x128xi1> to vector<1x128xi1>
    %12 = arith.xori %8, %11 : vector<1x128xi1>
    %13 = arith.andi %12, %6 : vector<1x128xi1>
    %14 = vector.broadcast %2 : i32 to vector<1x128xi32>
    %15 = arith.addi %4, %14 : vector<1x128xi32>
    %16 = arith.select %13, %15, %4 : vector<1x128xi1>, vector<1x128xi32>
    %c0 = arith.constant 0 : index
    %c0_3 = arith.constant 0 : index
    %17 = vector.load %arg1[%c0, %c0_3] : memref<4x128xbf16, #tpu.memory_space<vmem>>, vector<4x128xbf16>
    %18 = arith.extf %17 : vector<4x128xbf16> to vector<4x128xf32>
    %c0_4 = arith.constant 0 : index
    %c0_5 = arith.constant 0 : index
    %19 = vector.load %arg2[%c0_4, %c0_5] : memref<8x8xbf16, #tpu.memory_space<vmem>>, vector<8x8xbf16>
    %c1_i32_6 = arith.constant 1 : i32
    %20 = tpu.dynamic_rotate %18 by %c1_i32_6 dim 1 : vector<4x128xf32>, i32 -> vector<4x128xf32>
    %c1_i32_7 = arith.constant 1 : i32
    %21 = vector.broadcast %c1_i32_7 : i32 to vector<1x128xi32>
    %22 = arith.cmpi sge, %16, %21 : vector<1x128xi32>
    %cst = arith.constant 0.000000e+00 : f32
    %23 = vector.shape_cast %22 : vector<1x128xi1> to vector<1x128xi1>
    %24 = vector.broadcast %23 : vector<1x128xi1> to vector<4x128xi1>
    %25 = vector.broadcast %cst : f32 to vector<4x128xf32>
    %26 = arith.select %24, %20, %25 : vector<4x128xi1>, vector<4x128xf32>
    %27 = tpu.concatenate %26, %18 in 0 : vector<4x128xf32>, vector<4x128xf32> -> vector<8x128xf32>
    %28 = arith.truncf %27 : vector<8x128xf32> to vector<8x128xbf16>
    %cst_8 = arith.constant dense<0.000000e+00> : vector<8x128xf32>
    %29 = tpu.matmul %19, %28, %cst_8 {dimension_numbers = #tpu.dot_dimension_numbers<[1], [0], [0], [1], [0, 0, 1, 1], [], []>} : vector<8x8xbf16>, vector<8x128xbf16>, vector<8x128xf32> -> vector<8x128xf32>
    %c0_9 = arith.constant 0 : index
    %c0_10 = arith.constant 0 : index
    %30 = vector.load %arg3[%c0_9, %c0_10] : memref<8x1xf32, #tpu.memory_space<vmem>>, vector<8x1xf32>
    %31 = vector.broadcast %30 : vector<8x1xf32> to vector<8x128xf32>
    %32 = arith.addf %29, %31 : vector<8x128xf32>
    %cst_11 = arith.constant 0.000000e+00 : f32
    %33 = vector.broadcast %cst_11 : f32 to vector<8x128xf32>
    %34 = arith.maximumf %32, %33 : vector<8x128xf32>
    %c0_12 = arith.constant 0 : index
    %c0_13 = arith.constant 0 : index
    %35 = vector.load %arg4[%c0_12, %c0_13] : memref<8x16xbf16, #tpu.memory_space<vmem>>, vector<8x16xbf16>
    %c1_i32_14 = arith.constant 1 : i32
    %36 = tpu.dynamic_rotate %34 by %c1_i32_14 dim 1 : vector<8x128xf32>, i32 -> vector<8x128xf32>
    %c1_i32_15 = arith.constant 1 : i32
    %37 = vector.broadcast %c1_i32_15 : i32 to vector<1x128xi32>
    %38 = arith.cmpi sge, %16, %37 : vector<1x128xi32>
    %cst_16 = arith.constant 0.000000e+00 : f32
    %39 = vector.shape_cast %38 : vector<1x128xi1> to vector<1x128xi1>
    %40 = vector.broadcast %39 : vector<1x128xi1> to vector<8x128xi1>
    %41 = vector.broadcast %cst_16 : f32 to vector<8x128xf32>
    %42 = arith.select %40, %36, %41 : vector<8x128xi1>, vector<8x128xf32>
    %43 = tpu.concatenate %42, %34 in 0 : vector<8x128xf32>, vector<8x128xf32> -> vector<16x128xf32>
    %44 = arith.truncf %43 : vector<16x128xf32> to vector<16x128xbf16>
    %cst_17 = arith.constant dense<0.000000e+00> : vector<8x128xf32>
    %45 = tpu.matmul %35, %44, %cst_17 {dimension_numbers = #tpu.dot_dimension_numbers<[1], [0], [0], [1], [0, 0, 1, 1], [], []>} : vector<8x16xbf16>, vector<16x128xbf16>, vector<8x128xf32> -> vector<8x128xf32>
    %c0_18 = arith.constant 0 : index
    %c0_19 = arith.constant 0 : index
    %46 = vector.load %arg5[%c0_18, %c0_19] : memref<8x1xf32, #tpu.memory_space<vmem>>, vector<8x1xf32>
    %47 = vector.broadcast %46 : vector<8x1xf32> to vector<8x128xf32>
    %48 = arith.addf %45, %47 : vector<8x128xf32>
    %cst_20 = arith.constant 0.000000e+00 : f32
    %49 = vector.broadcast %cst_20 : f32 to vector<8x128xf32>
    %50 = arith.maximumf %48, %49 : vector<8x128xf32>
    %c0_21 = arith.constant 0 : index
    %c0_22 = arith.constant 0 : index
    %51 = vector.load %arg6[%c0_21, %c0_22] : memref<8x4xbf16, #tpu.memory_space<vmem>>, vector<8x4xbf16>
    %c0_23 = arith.constant 0 : index
    %c0_24 = arith.constant 0 : index
    %52 = vector.load %arg1[%c0_23, %c0_24] : memref<4x128xbf16, #tpu.memory_space<vmem>>, vector<4x128xbf16>
    %cst_25 = arith.constant dense<0.000000e+00> : vector<8x128xf32>
    %53 = tpu.matmul %51, %52, %cst_25 {dimension_numbers = #tpu.dot_dimension_numbers<[1], [0], [0], [1], [0, 0, 1, 1], [], []>} : vector<8x4xbf16>, vector<4x128xbf16>, vector<8x128xf32> -> vector<8x128xf32>
    %c0_26 = arith.constant 0 : index
    %c0_27 = arith.constant 0 : index
    %54 = vector.load %arg7[%c0_26, %c0_27] : memref<8x1xf32, #tpu.memory_space<vmem>>, vector<8x1xf32>
    %55 = vector.broadcast %54 : vector<8x1xf32> to vector<8x128xf32>
    %56 = arith.addf %53, %55 : vector<8x128xf32>
    %57 = arith.addf %50, %56 : vector<8x128xf32>
    %cst_28 = arith.constant 0.000000e+00 : f32
    %58 = vector.broadcast %cst_28 : f32 to vector<8x128xf32>
    %59 = arith.maximumf %57, %58 : vector<8x128xf32>
    %60 = arith.truncf %59 : vector<8x128xf32> to vector<8x128xbf16>
    %c0_29 = arith.constant 0 : index
    %c0_30 = arith.constant 0 : index
    %61 = vector.load %arg8[%c0_29, %c0_30] : memref<8x128xbf16, #tpu.memory_space<vmem>>, vector<8x128xbf16>
    tpu.vector_store %arg8[%c0_29, %c0_30], %60 {strides = array<i32>} : memref<8x128xbf16, #tpu.memory_space<vmem>>, vector<8x128xbf16>,
    return
  }
  func.func @transform_0(%arg0: i32) -> (i32, i32) {
    %c0_i32 = arith.constant 0 : i32
    %c0_i32_0 = arith.constant 0 : i32
    return %c0_i32, %arg0 : i32, i32
  }
  func.func @transform_1(%arg0: i32) -> (i32, i32) {
    %c0_i32 = arith.constant 0 : i32
    %c0_i32_0 = arith.constant 0 : i32
    %c0_i32_1 = arith.constant 0 : i32
    return %c0_i32, %c0_i32_0 : i32, i32
  }
  func.func @transform_2(%arg0: i32) -> (i32, i32) {
    %c0_i32 = arith.constant 0 : i32
    %c0_i32_0 = arith.constant 0 : i32
    %c0_i32_1 = arith.constant 0 : i32
    return %c0_i32, %c0_i32_0 : i32, i32
  }
  func.func @transform_3(%arg0: i32) -> (i32, i32) {
    %c0_i32 = arith.constant 0 : i32
    %c0_i32_0 = arith.constant 0 : i32
    %c0_i32_1 = arith.constant 0 : i32
    return %c0_i32, %c0_i32_0 : i32, i32
  }
  func.func @transform_4(%arg0: i32) -> (i32, i32) {
    %c0_i32 = arith.constant 0 : i32
    %c0_i32_0 = arith.constant 0 : i32
    %c0_i32_1 = arith.constant 0 : i32
    return %c0_i32, %c0_i32_0 : i32, i32
  }
  func.func @transform_5(%arg0: i32) -> (i32, i32) {
    %c0_i32 = arith.constant 0 : i32
    %c0_i32_0 = arith.constant 0 : i32
    %c0_i32_1 = arith.constant 0 : i32
    return %c0_i32, %c0_i32_0 : i32, i32
  }
  func.func @transform_6(%arg0: i32) -> (i32, i32) {
    %c0_i32 = arith.constant 0 : i32
    %c0_i32_0 = arith.constant 0 : i32
    %c0_i32_1 = arith.constant 0 : i32
    return %c0_i32, %c0_i32_0 : i32, i32
  }
  func.func @transform_7(%arg0: i32) -> (i32, i32) {
    %c0_i32 = arith.constant 0 : i32
    %c0_i32_0 = arith.constant 0 : i32
    return %c0_i32, %arg0 : i32, i32
  }
}

module attributes {stable_mosaic.version = 11 : i64} {
  func.func @_temporal_block_kernel(%arg0: i32, %arg1: memref<8x128xbf16, #tpu.memory_space<vmem>>, %arg2: memref<16x16xbf16, #tpu.memory_space<vmem>>, %arg3: memref<16x1xf32, #tpu.memory_space<vmem>>, %arg4: memref<16x32xbf16, #tpu.memory_space<vmem>>, %arg5: memref<16x1xf32, #tpu.memory_space<vmem>>, %arg6: memref<16x8xbf16, #tpu.memory_space<vmem>>, %arg7: memref<16x1xf32, #tpu.memory_space<vmem>>, %arg8: memref<16x128xbf16, #tpu.memory_space<vmem>>) attributes {dimension_semantics = [#tpu.dimension_semantics<parallel>], iteration_bounds = array<i64: 1>, scalar_prefetch = 0 : i64, scratch_operands = 0 : i64, tpu.core_type = #tpu.core_type<tc>, window_params = [{transform_indices = @transform_0, window_bounds = array<i64: 8, 128>}, {pipeline_mode = #tpu.pipeline_mode<synchronous>, transform_indices = @transform_1, window_bounds = array<i64: 16, 16>}, {pipeline_mode = #tpu.pipeline_mode<synchronous>, transform_indices = @transform_2, window_bounds = array<i64: 16, 1>}, {pipeline_mode = #tpu.pipeline_mode<synchronous>, transform_indices = @transform_3, window_bounds = array<i64: 16, 32>}, {pipeline_mode = #tpu.pipeline_mode<synchronous>, transform_indices = @transform_4, window_bounds = array<i64: 16, 1>}, {pipeline_mode = #tpu.pipeline_mode<synchronous>, transform_indices = @transform_5, window_bounds = array<i64: 16, 8>}, {pipeline_mode = #tpu.pipeline_mode<synchronous>, transform_indices = @transform_6, window_bounds = array<i64: 16, 1>}, {transform_indices = @transform_7, window_bounds = array<i64: 16, 128>}]} {
    %0 = tpu.iota {dimensions = array<i32: 1>} : vector<1x128xi32>
    %c16_i32 = arith.constant 16 : i32
    %c0_i32 = arith.constant 0 : i32
    %1 = arith.cmpi eq, %c16_i32, %c0_i32 : i32
    %c1_i32 = arith.constant 1 : i32
    %2 = arith.select %1, %c1_i32, %c16_i32 : i32
    %3 = vector.broadcast %2 : i32 to vector<1x128xi32>
    %4 = arith.remsi %0, %3 : vector<1x128xi32>
    %c0_i32_0 = arith.constant 0 : i32
    %5 = vector.broadcast %c0_i32_0 : i32 to vector<1x128xi32>
    %6 = arith.cmpi ne, %4, %5 : vector<1x128xi32>
    %c0_i32_1 = arith.constant 0 : i32
    %7 = vector.broadcast %c0_i32_1 : i32 to vector<1x128xi32>
    %8 = arith.cmpi slt, %4, %7 : vector<1x128xi32>
    %c0_i32_2 = arith.constant 0 : i32
    %9 = arith.cmpi slt, %2, %c0_i32_2 : i32
    %10 = vector.broadcast %9 : i1 to vector<1x128xi1>
    %11 = vector.broadcast %10 : vector<1x128xi1> to vector<1x128xi1>
    %12 = arith.xori %8, %11 : vector<1x128xi1>
    %13 = arith.andi %12, %6 : vector<1x128xi1>
    %14 = vector.broadcast %2 : i32 to vector<1x128xi32>
    %15 = arith.addi %4, %14 : vector<1x128xi32>
    %16 = arith.select %13, %15, %4 : vector<1x128xi1>, vector<1x128xi32>
    %c0 = arith.constant 0 : index
    %c0_3 = arith.constant 0 : index
    %17 = vector.load %arg1[%c0, %c0_3] : memref<8x128xbf16, #tpu.memory_space<vmem>>, vector<8x128xbf16>
    %18 = arith.extf %17 : vector<8x128xbf16> to vector<8x128xf32>
    %c0_4 = arith.constant 0 : index
    %c0_5 = arith.constant 0 : index
    %19 = vector.load %arg2[%c0_4, %c0_5] : memref<16x16xbf16, #tpu.memory_space<vmem>>, vector<16x16xbf16>
    %c4_i32 = arith.constant 4 : i32
    %20 = tpu.dynamic_rotate %18 by %c4_i32 dim 1 : vector<8x128xf32>, i32 -> vector<8x128xf32>
    %c4_i32_6 = arith.constant 4 : i32
    %21 = vector.broadcast %c4_i32_6 : i32 to vector<1x128xi32>
    %22 = arith.cmpi sge, %16, %21 : vector<1x128xi32>
    %cst = arith.constant 0.000000e+00 : f32
    %23 = vector.shape_cast %22 : vector<1x128xi1> to vector<1x128xi1>
    %24 = vector.broadcast %23 : vector<1x128xi1> to vector<8x128xi1>
    %25 = vector.broadcast %cst : f32 to vector<8x128xf32>
    %26 = arith.select %24, %20, %25 : vector<8x128xi1>, vector<8x128xf32>
    %27 = tpu.concatenate %26, %18 in 0 : vector<8x128xf32>, vector<8x128xf32> -> vector<16x128xf32>
    %28 = arith.truncf %27 : vector<16x128xf32> to vector<16x128xbf16>
    %cst_7 = arith.constant dense<0.000000e+00> : vector<16x128xf32>
    %29 = tpu.matmul %19, %28, %cst_7 {dimension_numbers = #tpu.dot_dimension_numbers<[1], [0], [0], [1], [0, 0, 1, 1], [], []>} : vector<16x16xbf16>, vector<16x128xbf16>, vector<16x128xf32> -> vector<16x128xf32>
    %c0_8 = arith.constant 0 : index
    %c0_9 = arith.constant 0 : index
    %30 = vector.load %arg3[%c0_8, %c0_9] : memref<16x1xf32, #tpu.memory_space<vmem>>, vector<16x1xf32>
    %31 = vector.broadcast %30 : vector<16x1xf32> to vector<16x128xf32>
    %32 = arith.addf %29, %31 : vector<16x128xf32>
    %cst_10 = arith.constant 0.000000e+00 : f32
    %33 = vector.broadcast %cst_10 : f32 to vector<16x128xf32>
    %34 = arith.maximumf %32, %33 : vector<16x128xf32>
    %c0_11 = arith.constant 0 : index
    %c0_12 = arith.constant 0 : index
    %35 = vector.load %arg4[%c0_11, %c0_12] : memref<16x32xbf16, #tpu.memory_space<vmem>>, vector<16x32xbf16>
    %c4_i32_13 = arith.constant 4 : i32
    %36 = tpu.dynamic_rotate %34 by %c4_i32_13 dim 1 : vector<16x128xf32>, i32 -> vector<16x128xf32>
    %c4_i32_14 = arith.constant 4 : i32
    %37 = vector.broadcast %c4_i32_14 : i32 to vector<1x128xi32>
    %38 = arith.cmpi sge, %16, %37 : vector<1x128xi32>
    %cst_15 = arith.constant 0.000000e+00 : f32
    %39 = vector.shape_cast %38 : vector<1x128xi1> to vector<1x128xi1>
    %40 = vector.broadcast %39 : vector<1x128xi1> to vector<16x128xi1>
    %41 = vector.broadcast %cst_15 : f32 to vector<16x128xf32>
    %42 = arith.select %40, %36, %41 : vector<16x128xi1>, vector<16x128xf32>
    %43 = tpu.concatenate %42, %34 in 0 : vector<16x128xf32>, vector<16x128xf32> -> vector<32x128xf32>
    %44 = arith.truncf %43 : vector<32x128xf32> to vector<32x128xbf16>
    %cst_16 = arith.constant dense<0.000000e+00> : vector<16x128xf32>
    %45 = tpu.matmul %35, %44, %cst_16 {dimension_numbers = #tpu.dot_dimension_numbers<[1], [0], [0], [1], [0, 0, 1, 1], [], []>} : vector<16x32xbf16>, vector<32x128xbf16>, vector<16x128xf32> -> vector<16x128xf32>
    %c0_17 = arith.constant 0 : index
    %c0_18 = arith.constant 0 : index
    %46 = vector.load %arg5[%c0_17, %c0_18] : memref<16x1xf32, #tpu.memory_space<vmem>>, vector<16x1xf32>
    %47 = vector.broadcast %46 : vector<16x1xf32> to vector<16x128xf32>
    %48 = arith.addf %45, %47 : vector<16x128xf32>
    %cst_19 = arith.constant 0.000000e+00 : f32
    %49 = vector.broadcast %cst_19 : f32 to vector<16x128xf32>
    %50 = arith.maximumf %48, %49 : vector<16x128xf32>
    %c0_20 = arith.constant 0 : index
    %c0_21 = arith.constant 0 : index
    %51 = vector.load %arg6[%c0_20, %c0_21] : memref<16x8xbf16, #tpu.memory_space<vmem>>, vector<16x8xbf16>
    %c0_22 = arith.constant 0 : index
    %c0_23 = arith.constant 0 : index
    %52 = vector.load %arg1[%c0_22, %c0_23] : memref<8x128xbf16, #tpu.memory_space<vmem>>, vector<8x128xbf16>
    %cst_24 = arith.constant dense<0.000000e+00> : vector<16x128xf32>
    %53 = tpu.matmul %51, %52, %cst_24 {dimension_numbers = #tpu.dot_dimension_numbers<[1], [0], [0], [1], [0, 0, 1, 1], [], []>} : vector<16x8xbf16>, vector<8x128xbf16>, vector<16x128xf32> -> vector<16x128xf32>
    %c0_25 = arith.constant 0 : index
    %c0_26 = arith.constant 0 : index
    %54 = vector.load %arg7[%c0_25, %c0_26] : memref<16x1xf32, #tpu.memory_space<vmem>>, vector<16x1xf32>
    %55 = vector.broadcast %54 : vector<16x1xf32> to vector<16x128xf32>
    %56 = arith.addf %53, %55 : vector<16x128xf32>
    %57 = arith.addf %50, %56 : vector<16x128xf32>
    %cst_27 = arith.constant 0.000000e+00 : f32
    %58 = vector.broadcast %cst_27 : f32 to vector<16x128xf32>
    %59 = arith.maximumf %57, %58 : vector<16x128xf32>
    %60 = arith.truncf %59 : vector<16x128xf32> to vector<16x128xbf16>
    %c0_28 = arith.constant 0 : index
    %c0_29 = arith.constant 0 : index
    %61 = vector.load %arg8[%c0_28, %c0_29] : memref<16x128xbf16, #tpu.memory_space<vmem>>, vector<16x128xbf16>
    tpu.vector_store %arg8[%c0_28, %c0_29], %60 {strides = array<i32>} : memref<16x128xbf16, #tpu.memory_space<vmem>>, vector<16x128xbf16>,
    return
  }
  func.func @transform_0(%arg0: i32) -> (i32, i32) {
    %c0_i32 = arith.constant 0 : i32
    %c0_i32_0 = arith.constant 0 : i32
    return %c0_i32, %arg0 : i32, i32
  }
  func.func @transform_1(%arg0: i32) -> (i32, i32) {
    %c0_i32 = arith.constant 0 : i32
    %c0_i32_0 = arith.constant 0 : i32
    %c0_i32_1 = arith.constant 0 : i32
    return %c0_i32, %c0_i32_0 : i32, i32
  }
  func.func @transform_2(%arg0: i32) -> (i32, i32) {
    %c0_i32 = arith.constant 0 : i32
    %c0_i32_0 = arith.constant 0 : i32
    %c0_i32_1 = arith.constant 0 : i32
    return %c0_i32, %c0_i32_0 : i32, i32
  }
  func.func @transform_3(%arg0: i32) -> (i32, i32) {
    %c0_i32 = arith.constant 0 : i32
    %c0_i32_0 = arith.constant 0 : i32
    %c0_i32_1 = arith.constant 0 : i32
    return %c0_i32, %c0_i32_0 : i32, i32
  }
  func.func @transform_4(%arg0: i32) -> (i32, i32) {
    %c0_i32 = arith.constant 0 : i32
    %c0_i32_0 = arith.constant 0 : i32
    %c0_i32_1 = arith.constant 0 : i32
    return %c0_i32, %c0_i32_0 : i32, i32
  }
  func.func @transform_5(%arg0: i32) -> (i32, i32) {
    %c0_i32 = arith.constant 0 : i32
    %c0_i32_0 = arith.constant 0 : i32
    %c0_i32_1 = arith.constant 0 : i32
    return %c0_i32, %c0_i32_0 : i32, i32
  }
  func.func @transform_6(%arg0: i32) -> (i32, i32) {
    %c0_i32 = arith.constant 0 : i32
    %c0_i32_0 = arith.constant 0 : i32
    %c0_i32_1 = arith.constant 0 : i32
    return %c0_i32, %c0_i32_0 : i32, i32
  }
  func.func @transform_7(%arg0: i32) -> (i32, i32) {
    %c0_i32 = arith.constant 0 : i32
    %c0_i32_0 = arith.constant 0 : i32
    return %c0_i32, %arg0 : i32, i32
  }
}

</mosaic_0001>

<llo_original>
// kernel: temporal_conv_net.4
$region0: #{temporal_conv_net.4}
  #allocation0 [shape = 'u32[]', space=smem, size = 0x4, offset = 0x4, fixed_abs, tag = 'smem constant byte address 0x4 - core index']
  #allocation1 [shape = 'u32[144,128]{1,0:T(1,128)}', space=vmem, size = 0x12000, scoped, tag = 'internal scratch']
  %s0 = inlined_call_operand.vmem [shape: bf16[8,128], index: 0, kind: input, shape index: {}]
  %s1 = inlined_call_operand.vmem [shape: bf16[8,16], index: 1, kind: input, shape index: {}]
  %s2 = inlined_call_operand.vmem [shape: f32[8,1], index: 2, kind: input, shape index: {}]
  %s3 = inlined_call_operand.vmem [shape: bf16[8,16], index: 3, kind: input, shape index: {}]
  %s4 = inlined_call_operand.vmem [shape: f32[8,1], index: 4, kind: input, shape index: {}]
  %s5 = inlined_call_operand.vmem [shape: bf16[8,128], index: 5, kind: output, shape index: {}]
  %s6 = sld [smem:[#allocation0]]
  $region30: #{temporal_conv_net.4} parent=0
    _
  %s8 = ssub.s32 1, %s6
  %s9 = scalar_select 0, %s8, %s6
  // Predicated region
  $region2: #{temporal_conv_net.4} parent=0 // pred_check
    _
  $region3: #{temporal_conv_net.4} parent=0 // pred_check_branch
    %11 = sbr.rel (0) target = $region5
  $region4: #{temporal_conv_net.4} parent=0 // pred_region
    _
  $region5: #{temporal_conv_net.4} parent=0 // pred_fallthru
    _
  // Predicated region
  $region6: #{temporal_conv_net.4} parent=0 // pred_check
    _
  $region7: #{temporal_conv_net.4} parent=0 // pred_check_branch
    %13 = sbr.rel (0) target = $region9
  $region8: #{temporal_conv_net.4} parent=0 // pred_region
    _
  $region9: #{temporal_conv_net.4} parent=0 // pred_fallthru
    _
  // Predicated region
  $region10: #{temporal_conv_net.4} parent=0 // pred_check
    _
  $region11: #{temporal_conv_net.4} parent=0 // pred_check_branch
    %15 = sbr.rel (0) target = $region13
  $region12: #{temporal_conv_net.4} parent=0 // pred_region
    _
  $region13: #{temporal_conv_net.4} parent=0 // pred_fallthru
    _
  // Predicated region
  $region14: #{temporal_conv_net.4} parent=0 // pred_check
    _
  $region15: #{temporal_conv_net.4} parent=0 // pred_check_branch
    %17 = sbr.rel (0) target = $region17
  $region16: #{temporal_conv_net.4} parent=0 // pred_region
    _
  $region17: #{temporal_conv_net.4} parent=0 // pred_fallthru
    _
  // Predicated region
  $region18: #{temporal_conv_net.4} parent=0 // pred_check
    _
  $region19: #{temporal_conv_net.4} parent=0 // pred_check_branch
    %19 = sbr.rel (0) target = $region21
  $region20: #{temporal_conv_net.4} parent=0 // pred_region
    _
  $region21: #{temporal_conv_net.4} parent=0 // pred_fallthru
    _
  %v21 = vlaneseq
  %v22 = vand.u32 %v21, 127
  %vm23 = vcmp.lt.s32.totalorder %v22, 0
  %v24 = vsub.s32 0, %v22
  %v25 = vsel %vm23, %v24, %v22
  %v26 = vshrl.u32 %v25, 4
  %v27 = vand.u32 %v25, 15
  %v28 = vsub.s32 0, %v27
  %v29 = vsel %vm23, %v28, %v27
  %vm30 = vcmp.ne.s32.totalorder %v29, 0
  %vm31 = vcmp.lt.s32.totalorder %v29, 0
  %vm32 = vmand %vm31, %vm30
  %v33 = vadd.s32 %v29, 16
  %v34 = vsel %vm32, %v33, %v29
  %v35 = vld [vmem:[%s0] sm:$0xf]
  %v36 = vunpack.c.l.bf16 %v35
  %v37 = vld [vmem:[%s1] sm:$0xf]
  %38 = vrot.lane.b32.xlu0 %v36, 2
  %v39 = vpop.permute.xlu0 %38
  %vm40 = vcmp.ge.s32.totalorder %v34, 2
  %v41 = vsel %vm40, 1, 0
  %vm42 = vcmp.eq.s32.totalorder %v41, 1
  %v43 = vsel %vm42, %v39, 0.0
  %v44 = vpack.c.bf16 %v36, %v43
  %v45 = vld [vmem:[%s2] sm:$0xff]
  %47 = vset.pattern.permute.xlu0 0
  %48 = vperm.xlu0 %47, %v45
  %v49 = vpop.permute.xlu0 %48
  %vm51 = vcmask 130048
  %v53 = vsel %vm51, %v37, 0
  %55 = vmatprep.subr.bf16.mxu0 0
  %56 = vmatpush1.bf16.msra.mxu0 %v44
  %57 = vmatprep.subr.bf16.mxu0 0
  %58 = vmatpush1.bf16.msra.mxu0 0
  %59 = vmatprep.subr.bf16.mxu0 0
  %60 = vmatpush1.bf16.msra.mxu0 0
  %61 = vmatprep.subr.bf16.mxu0 0
  %62 = vmatpush1.bf16.msra.mxu0 0
  %63 = vmatprep.subr.bf16.mxu0 0
  %64 = vmatpush1.bf16.msra.mxu0 0
  %65 = vmatprep.subr.bf16.mxu0 0
  %66 = vmatpush1.bf16.msra.mxu0 0
  %67 = vmatprep.subr.bf16.mxu0 0
  %68 = vmatpush1.bf16.msra.mxu0 0
  %69 = vmatprep.subr.bf16.mxu0 0
  %70 = vmatpush1.bf16.msra.mxu0 0
  %71 = vmatprep.subr.bf16.mxu0 0
  %72 = vmatpush1.bf16.msra.mxu0 0
  %73 = vmatprep.subr.bf16.mxu0 0
  %74 = vmatpush1.bf16.msra.mxu0 0
  %75 = vmatprep.subr.bf16.mxu0 0
  %76 = vmatpush1.bf16.msra.mxu0 0
  %77 = vmatprep.subr.bf16.mxu0 0
  %78 = vmatpush1.bf16.msra.mxu0 0
  %79 = vmatprep.subr.bf16.mxu0 0
  %80 = vmatpush1.bf16.msra.mxu0 0
  %81 = vmatprep.subr.bf16.mxu0 0
  %82 = vmatpush1.bf16.msra.mxu0 0
  %83 = vmatprep.subr.bf16.mxu0 0
  %84 = vmatpush1.bf16.msra.mxu0 0
  %85 = vmatprep.subr.bf16.mxu0 0
  %86 = vmatpush1.bf16.msra.mxu0 0
  %87 = vmatprep.mubr.bf16.mxu0 0
  %88 = vmatmul.mubr.bf16.gmra.mrb[0].mxu0 %v53
  %v89 = vpop.f32.mrb[0].mxu0
  %v90 = vadd.f32 %v49, %v89
  %v91 = vpop.f32.mrb[0].mxu0
  %v92 = vpop.f32.mrb[0].mxu0
  %v93 = vpop.f32.mrb[0].mxu0
  %94 = vdwg.mxu0
  %v95 = vmax.f32 %v90, 0.0
  %v96 = vld [vmem:[%s3] sm:$0xf]
  %97 = vrot.lane.b32.xlu0 %v95, 2
  %v98 = vpop.permute.xlu0 %97
  %v99 = vsel %vm42, %v98, 0.0
  %v100 = vpack.c.bf16 %v95, %v99
  %v101 = vld [vmem:[%s4] sm:$0xff]
  %103 = vset.pattern.permute.xlu0 0
  %104 = vperm.xlu0 %103, %v101
  %v105 = vpop.permute.xlu0 %104
  %v108 = vsel %vm51, %v96, 0
  %110 = vmatprep.subr.bf16.mxu0 0
  %111 = vmatpush1.bf16.msra.mxu0 %v100
  %112 = vmatprep.subr.bf16.mxu0 0
  %113 = vmatpush1.bf16.msra.mxu0 0
  %114 = vmatprep.subr.bf16.mxu0 0
  %115 = vmatpush1.bf16.msra.mxu0 0
  %116 = vmatprep.subr.bf16.mxu0 0
  %117 = vmatpush1.bf16.msra.mxu0 0
  %118 = vmatprep.subr.bf16.mxu0 0
  %119 = vmatpush1.bf16.msra.mxu0 0
  %120 = vmatprep.subr.bf16.mxu0 0
  %121 = vmatpush1.bf16.msra.mxu0 0
  %122 = vmatprep.subr.bf16.mxu0 0
  %123 = vmatpush1.bf16.msra.mxu0 0
  %124 = vmatprep.subr.bf16.mxu0 0
  %125 = vmatpush1.bf16.msra.mxu0 0
  %126 = vmatprep.subr.bf16.mxu0 0
  %127 = vmatpush1.bf16.msra.mxu0 0
  %128 = vmatprep.subr.bf16.mxu0 0
  %129 = vmatpush1.bf16.msra.mxu0 0
  %130 = vmatprep.subr.bf16.mxu0 0
  %131 = vmatpush1.bf16.msra.mxu0 0
  %132 = vmatprep.subr.bf16.mxu0 0
  %133 = vmatpush1.bf16.msra.mxu0 0
  %134 = vmatprep.subr.bf16.mxu0 0
  %135 = vmatpush1.bf16.msra.mxu0 0
  %136 = vmatprep.subr.bf16.mxu0 0
  %137 = vmatpush1.bf16.msra.mxu0 0
  %138 = vmatprep.subr.bf16.mxu0 0
  %139 = vmatpush1.bf16.msra.mxu0 0
  %140 = vmatprep.subr.bf16.mxu0 0
  %141 = vmatpush1.bf16.msra.mxu0 0
  %142 = vmatprep.mubr.bf16.mxu0 0
  %143 = vmatmul.mubr.bf16.gmra.mrb[0].mxu0 %v108
  %v144 = vpop.f32.mrb[0].mxu0
  %v145 = vadd.f32 %v105, %v144
  %v146 = vpop.f32.mrb[0].mxu0
  %v147 = vpop.f32.mrb[0].mxu0
  %v148 = vpop.f32.mrb[0].mxu0
  %149 = vdwg.mxu0
  %v150 = vmax.f32 %v145, 0.0
  %v151 = vadd.f32 %v150, %v36
  %v152 = vmax.f32 %v151, 0.0
  %v153 = vpack.c.bf16 %v152, %v152
  %154 = vst [vmem:[%s5] sm:$0xf] %v153
  // Predicated region
  $region22: #{temporal_conv_net.4} parent=0 // pred_check
    _
  $region23: #{temporal_conv_net.4} parent=0 // pred_check_branch
    %156 = sbr.rel (0) target = $region25
  $region24: #{temporal_conv_net.4} parent=0 // pred_region
    _
  $region25: #{temporal_conv_net.4} parent=0 // pred_fallthru
    _
  // Predicated region
  $region26: #{temporal_conv_net.4} parent=0 // pred_check
    _
  $region27: #{temporal_conv_net.4} parent=0 // pred_check_branch
    %158 = sbr.rel (0) target = $region29
  $region28: #{temporal_conv_net.4} parent=0 // pred_region
    _
  $region29: #{temporal_conv_net.4} parent=0 // pred_fallthru
    _

// kernel: temporal_conv_net.3
$region0: #{temporal_conv_net.3}
  #allocation0 [shape = 'u32[]', space=smem, size = 0x4, offset = 0x4, fixed_abs, tag = 'smem constant byte address 0x4 - core index']
  #allocation1 [shape = 'u32[144,128]{1,0:T(1,128)}', space=vmem, size = 0x12000, scoped, tag = 'internal scratch']
  %s0 = inlined_call_operand.vmem [shape: bf16[4,128], index: 0, kind: input, shape index: {}]
  %s1 = inlined_call_operand.vmem [shape: bf16[8,8], index: 1, kind: input, shape index: {}]
  %s2 = inlined_call_operand.vmem [shape: f32[8,1], index: 2, kind: input, shape index: {}]
  %s3 = inlined_call_operand.vmem [shape: bf16[8,16], index: 3, kind: input, shape index: {}]
  %s4 = inlined_call_operand.vmem [shape: f32[8,1], index: 4, kind: input, shape index: {}]
  %s5 = inlined_call_operand.vmem [shape: bf16[8,4], index: 5, kind: input, shape index: {}]
  %s6 = inlined_call_operand.vmem [shape: f32[8,1], index: 6, kind: input, shape index: {}]
  %s7 = inlined_call_operand.vmem [shape: bf16[8,128], index: 7, kind: output, shape index: {}]
  %s8 = sld [smem:[#allocation0]]
  $region38: #{temporal_conv_net.3} parent=0
    _
  %s10 = ssub.s32 1, %s8
  %s11 = scalar_select 0, %s10, %s8
  // Predicated region
  $region2: #{temporal_conv_net.3} parent=0 // pred_check
    _
  $region3: #{temporal_conv_net.3} parent=0 // pred_check_branch
    %13 = sbr.rel (0) target = $region5
  $region4: #{temporal_conv_net.3} parent=0 // pred_region
    _
  $region5: #{temporal_conv_net.3} parent=0 // pred_fallthru
    _
  // Predicated region
  $region6: #{temporal_conv_net.3} parent=0 // pred_check
    _
  $region7: #{temporal_conv_net.3} parent=0 // pred_check_branch
    %15 = sbr.rel (0) target = $region9
  $region8: #{temporal_conv_net.3} parent=0 // pred_region
    _
  $region9: #{temporal_conv_net.3} parent=0 // pred_fallthru
    _
  // Predicated region
  $region10: #{temporal_conv_net.3} parent=0 // pred_check
    _
  $region11: #{temporal_conv_net.3} parent=0 // pred_check_branch
    %17 = sbr.rel (0) target = $region13
  $region12: #{temporal_conv_net.3} parent=0 // pred_region
    _
  $region13: #{temporal_conv_net.3} parent=0 // pred_fallthru
    _
  // Predicated region
  $region14: #{temporal_conv_net.3} parent=0 // pred_check
    _
  $region15: #{temporal_conv_net.3} parent=0 // pred_check_branch
    %19 = sbr.rel (0) target = $region17
  $region16: #{temporal_conv_net.3} parent=0 // pred_region
    _
  $region17: #{temporal_conv_net.3} parent=0 // pred_fallthru
    _
  // Predicated region
  $region18: #{temporal_conv_net.3} parent=0 // pred_check
    _
  $region19: #{temporal_conv_net.3} parent=0 // pred_check_branch
    %21 = sbr.rel (0) target = $region21
  $region20: #{temporal_conv_net.3} parent=0 // pred_region
    _
  $region21: #{temporal_conv_net.3} parent=0 // pred_fallthru
    _
  // Predicated region
  $region22: #{temporal_conv_net.3} parent=0 // pred_check
    _
  $region23: #{temporal_conv_net.3} parent=0 // pred_check_branch
    %23 = sbr.rel (0) target = $region25
  $region24: #{temporal_conv_net.3} parent=0 // pred_region
    _
  $region25: #{temporal_conv_net.3} parent=0 // pred_fallthru
    _
  // Predicated region
  $region26: #{temporal_conv_net.3} parent=0 // pred_check
    _
  $region27: #{temporal_conv_net.3} parent=0 // pred_check_branch
    %25 = sbr.rel (0) target = $region29
  $region28: #{temporal_conv_net.3} parent=0 // pred_region
    _
  $region29: #{temporal_conv_net.3} parent=0 // pred_fallthru
    _
  %v27 = vlaneseq
  %v28 = vand.u32 %v27, 127
  %vm29 = vcmp.lt.s32.totalorder %v28, 0
  %v30 = vsub.s32 0, %v28
  %v31 = vsel %vm29, %v30, %v28
  %v32 = vshrl.u32 %v31, 4
  %v33 = vand.u32 %v31, 15
  %v34 = vsub.s32 0, %v33
  %v35 = vsel %vm29, %v34, %v33
  %vm36 = vcmp.ne.s32.totalorder %v35, 0
  %vm37 = vcmp.lt.s32.totalorder %v35, 0
  %vm38 = vmand %vm37, %vm36
  %v39 = vadd.s32 %v35, 16
  %v40 = vsel %vm38, %v39, %v35
  %v41 = vld [vmem:[%s0] sm:$0x3]
  %v42 = vunpack.c.l.bf16 %v41
  %v43 = vld [vmem:[%s1] sm:$0xf]
  %44 = vrot.lane.b32.xlu0 %v42, 1
  %v45 = vpop.permute.xlu0 %44
  %vm46 = vcmp.ge.s32.totalorder %v40, 1
  %v47 = vsel %vm46, 1, 0
  %vm48 = vcmp.eq.s32.totalorder %v47, 1
  %v49 = vsel %vm48, %v45, 0.0
  %v51 = vcombine.low %v42, %v42
  %vm53 = vcmask 1043456
  %v54 = vsel %vm53, %v49, %v51
  %v55 = vpack.c.bf16 %v54, %v54
  %v56 = vld [vmem:[%s2] sm:$0xff]
  %58 = vset.pattern.permute.xlu0 0
  %59 = vperm.xlu0 %58, %v56
  %v60 = vpop.permute.xlu0 %59
  %vm62 = vcmask 64512
  %v64 = vsel %vm62, %v43, 0
  %v67 = vsel %vm53, %v55, 0
  %69 = vmatprep.subr.bf16.mxu0 0
  %70 = vmatpush1.bf16.msra.mxu0 %v67
  %71 = vmatprep.subr.bf16.mxu0 0
  %72 = vmatpush1.bf16.msra.mxu0 0
  %73 = vmatprep.subr.bf16.mxu0 0
  %74 = vmatpush1.bf16.msra.mxu0 0
  %75 = vmatprep.subr.bf16.mxu0 0
  %76 = vmatpush1.bf16.msra.mxu0 0
  %77 = vmatprep.subr.bf16.mxu0 0
  %78 = vmatpush1.bf16.msra.mxu0 0
  %79 = vmatprep.subr.bf16.mxu0 0
  %80 = vmatpush1.bf16.msra.mxu0 0
  %81 = vmatprep.subr.bf16.mxu0 0
  %82 = vmatpush1.bf16.msra.mxu0 0
  %83 = vmatprep.subr.bf16.mxu0 0
  %84 = vmatpush1.bf16.msra.mxu0 0
  %85 = vmatprep.subr.bf16.mxu0 0
  %86 = vmatpush1.bf16.msra.mxu0 0
  %87 = vmatprep.subr.bf16.mxu0 0
  %88 = vmatpush1.bf16.msra.mxu0 0
  %89 = vmatprep.subr.bf16.mxu0 0
  %90 = vmatpush1.bf16.msra.mxu0 0
  %91 = vmatprep.subr.bf16.mxu0 0
  %92 = vmatpush1.bf16.msra.mxu0 0
  %93 = vmatprep.subr.bf16.mxu0 0
  %94 = vmatpush1.bf16.msra.mxu0 0
  %95 = vmatprep.subr.bf16.mxu0 0
  %96 = vmatpush1.bf16.msra.mxu0 0
  %97 = vmatprep.subr.bf16.mxu0 0
  %98 = vmatpush1.bf16.msra.mxu0 0
  %99 = vmatprep.subr.bf16.mxu0 0
  %100 = vmatpush1.bf16.msra.mxu0 0
  %101 = vmatprep.mubr.bf16.mxu0 0
  %102 = vmatmul.mubr.bf16.gmra.mrb[0].mxu0 %v64
  %v103 = vpop.f32.mrb[0].mxu0
  %v104 = vadd.f32 %v60, %v103
  %v105 = vpop.f32.mrb[0].mxu0
  %v106 = vpop.f32.mrb[0].mxu0
  %v107 = vpop.f32.mrb[0].mxu0
  %108 = vdwg.mxu0
  %v109 = vmax.f32 %v104, 0.0
  %v110 = vld [vmem:[%s3] sm:$0xf]
  %111 = vrot.lane.b32.xlu0 %v109, 1
  %v112 = vpop.permute.xlu0 %111
  %v113 = vsel %vm48, %v112, 0.0
  %v114 = vpack.c.bf16 %v109, %v113
  %v115 = vld [vmem:[%s4] sm:$0xff]
  %117 = vset.pattern.permute.xlu0 0
  %118 = vperm.xlu0 %117, %v115
  %v119 = vpop.permute.xlu0 %118
  %vm121 = vcmask 130048
  %v123 = vsel %vm121, %v110, 0
  %125 = vmatprep.subr.bf16.mxu0 0
  %126 = vmatpush1.bf16.msra.mxu0 %v114
  %127 = vmatprep.subr.bf16.mxu0 0
  %128 = vmatpush1.bf16.msra.mxu0 0
  %129 = vmatprep.subr.bf16.mxu0 0
  %130 = vmatpush1.bf16.msra.mxu0 0
  %131 = vmatprep.subr.bf16.mxu0 0
  %132 = vmatpush1.bf16.msra.mxu0 0
  %133 = vmatprep.subr.bf16.mxu0 0
  %134 = vmatpush1.bf16.msra.mxu0 0
  %135 = vmatprep.subr.bf16.mxu0 0
  %136 = vmatpush1.bf16.msra.mxu0 0
  %137 = vmatprep.subr.bf16.mxu0 0
  %138 = vmatpush1.bf16.msra.mxu0 0
  %139 = vmatprep.subr.bf16.mxu0 0
  %140 = vmatpush1.bf16.msra.mxu0 0
  %141 = vmatprep.subr.bf16.mxu0 0
  %142 = vmatpush1.bf16.msra.mxu0 0
  %143 = vmatprep.subr.bf16.mxu0 0
  %144 = vmatpush1.bf16.msra.mxu0 0
  %145 = vmatprep.subr.bf16.mxu0 0
  %146 = vmatpush1.bf16.msra.mxu0 0
  %147 = vmatprep.subr.bf16.mxu0 0
  %148 = vmatpush1.bf16.msra.mxu0 0
  %149 = vmatprep.subr.bf16.mxu0 0
  %150 = vmatpush1.bf16.msra.mxu0 0
  %151 = vmatprep.subr.bf16.mxu0 0
  %152 = vmatpush1.bf16.msra.mxu0 0
  %153 = vmatprep.subr.bf16.mxu0 0
  %154 = vmatpush1.bf16.msra.mxu0 0
  %155 = vmatprep.subr.bf16.mxu0 0
  %156 = vmatpush1.bf16.msra.mxu0 0
  %157 = vmatprep.mubr.bf16.mxu0 0
  %158 = vmatmul.mubr.bf16.gmra.mrb[0].mxu0 %v123
  %v159 = vpop.f32.mrb[0].mxu0
  %v160 = vadd.f32 %v119, %v159
  %v161 = vpop.f32.mrb[0].mxu0
  %v162 = vpop.f32.mrb[0].mxu0
  %v163 = vpop.f32.mrb[0].mxu0
  %164 = vdwg.mxu0
  %v165 = vmax.f32 %v160, 0.0
  %v166 = vld [vmem:[%s5] sm:$0xf]
  %v167 = vld [vmem:[%s6] sm:$0xff]
  %169 = vset.pattern.permute.xlu0 0
  %170 = vperm.xlu0 %169, %v167
  %v171 = vpop.permute.xlu0 %170
  %vm173 = vcmask 31744
  %v175 = vsel %vm173, %v166, 0
  %vm177 = vcmask 1041408
  %v179 = vsel %vm177, %v41, 0
  %181 = vmatprep.subr.bf16.mxu0 0
  %182 = vmatpush1.bf16.msra.mxu0 %v179
  %183 = vmatprep.subr.bf16.mxu0 0
  %184 = vmatpush1.bf16.msra.mxu0 0
  %185 = vmatprep.subr.bf16.mxu0 0
  %186 = vmatpush1.bf16.msra.mxu0 0
  %187 = vmatprep.subr.bf16.mxu0 0
  %188 = vmatpush1.bf16.msra.mxu0 0
  %189 = vmatprep.subr.bf16.mxu0 0
  %190 = vmatpush1.bf16.msra.mxu0 0
  %191 = vmatprep.subr.bf16.mxu0 0
  %192 = vmatpush1.bf16.msra.mxu0 0
  %193 = vmatprep.subr.bf16.mxu0 0
  %194 = vmatpush1.bf16.msra.mxu0 0
  %195 = vmatprep.subr.bf16.mxu0 0
  %196 = vmatpush1.bf16.msra.mxu0 0
  %197 = vmatprep.subr.bf16.mxu0 0
  %198 = vmatpush1.bf16.msra.mxu0 0
  %199 = vmatprep.subr.bf16.mxu0 0
  %200 = vmatpush1.bf16.msra.mxu0 0
  %201 = vmatprep.subr.bf16.mxu0 0
  %202 = vmatpush1.bf16.msra.mxu0 0
  %203 = vmatprep.subr.bf16.mxu0 0
  %204 = vmatpush1.bf16.msra.mxu0 0
  %205 = vmatprep.subr.bf16.mxu0 0
  %206 = vmatpush1.bf16.msra.mxu0 0
  %207 = vmatprep.subr.bf16.mxu0 0
  %208 = vmatpush1.bf16.msra.mxu0 0
  %209 = vmatprep.subr.bf16.mxu0 0
  %210 = vmatpush1.bf16.msra.mxu0 0
  %211 = vmatprep.subr.bf16.mxu0 0
  %212 = vmatpush1.bf16.msra.mxu0 0
  %213 = vmatprep.mubr.bf16.mxu0 0
  %214 = vmatmul.mubr.bf16.gmra.mrb[0].mxu0 %v175
  %v215 = vpop.f32.mrb[0].mxu0
  %v216 = vadd.f32 %v171, %v215
  %v217 = vpop.f32.mrb[0].mxu0
  %v218 = vpop.f32.mrb[0].mxu0
  %v219 = vpop.f32.mrb[0].mxu0
  %220 = vdwg.mxu0
  %v221 = vadd.f32 %v165, %v216
  %v222 = vmax.f32 %v221, 0.0
  %v223 = vpack.c.bf16 %v222, %v222
  %224 = vst [vmem:[%s7] sm:$0xf] %v223
  // Predicated region
  $region30: #{temporal_conv_net.3} parent=0 // pred_check
    _
  $region31: #{temporal_conv_net.3} parent=0 // pred_check_branch
    %226 = sbr.rel (0) target = $region33
  $region32: #{temporal_conv_net.3} parent=0 // pred_region
    _
  $region33: #{temporal_conv_net.3} parent=0 // pred_fallthru
    _
  // Predicated region
  $region34: #{temporal_conv_net.3} parent=0 // pred_check
    _
  $region35: #{temporal_conv_net.3} parent=0 // pred_check_branch
    %228 = sbr.rel (0) target = $region37
  $region36: #{temporal_conv_net.3} parent=0 // pred_region
    _
  $region37: #{temporal_conv_net.3} parent=0 // pred_fallthru
    _

// kernel: temporal_conv_net.5
$region0: #{temporal_conv_net.5}
  #allocation0 [shape = 'u32[]', space=smem, size = 0x4, offset = 0x4, fixed_abs, tag = 'smem constant byte address 0x4 - core index']
  #allocation1 [shape = 'u32[144,128]{1,0:T(1,128)}', space=vmem, size = 0x12000, scoped, tag = 'internal scratch']
  %s0 = inlined_call_operand.vmem [shape: bf16[8,128], index: 0, kind: input, shape index: {}]
  %s1 = inlined_call_operand.vmem [shape: bf16[16,16], index: 1, kind: input, shape index: {}]
  %s2 = inlined_call_operand.vmem [shape: f32[16,1], index: 2, kind: input, shape index: {}]
  %s3 = inlined_call_operand.vmem [shape: bf16[16,32], index: 3, kind: input, shape index: {}]
  %s4 = inlined_call_operand.vmem [shape: f32[16,1], index: 4, kind: input, shape index: {}]
  %s5 = inlined_call_operand.vmem [shape: bf16[16,8], index: 5, kind: input, shape index: {}]
  %s6 = inlined_call_operand.vmem [shape: f32[16,1], index: 6, kind: input, shape index: {}]
  %s7 = inlined_call_operand.vmem [shape: bf16[16,128], index: 7, kind: output, shape index: {}]
  %s8 = sld [smem:[#allocation0]]
  $region38: #{temporal_conv_net.5} parent=0
    _
  %s10 = ssub.s32 1, %s8
  %s11 = scalar_select 0, %s10, %s8
  // Predicated region
  $region2: #{temporal_conv_net.5} parent=0 // pred_check
    _
  $region3: #{temporal_conv_net.5} parent=0 // pred_check_branch
    %13 = sbr.rel (0) target = $region5
  $region4: #{temporal_conv_net.5} parent=0 // pred_region
    _
  $region5: #{temporal_conv_net.5} parent=0 // pred_fallthru
    _
  // Predicated region
  $region6: #{temporal_conv_net.5} parent=0 // pred_check
    _
  $region7: #{temporal_conv_net.5} parent=0 // pred_check_branch
    %15 = sbr.rel (0) target = $region9
  $region8: #{temporal_conv_net.5} parent=0 // pred_region
    _
  $region9: #{temporal_conv_net.5} parent=0 // pred_fallthru
    _
  // Predicated region
  $region10: #{temporal_conv_net.5} parent=0 // pred_check
    _
  $region11: #{temporal_conv_net.5} parent=0 // pred_check_branch
    %17 = sbr.rel (0) target = $region13
  $region12: #{temporal_conv_net.5} parent=0 // pred_region
    _
  $region13: #{temporal_conv_net.5} parent=0 // pred_fallthru
    _
  // Predicated region
  $region14: #{temporal_conv_net.5} parent=0 // pred_check
    _
  $region15: #{temporal_conv_net.5} parent=0 // pred_check_branch
    %19 = sbr.rel (0) target = $region17
  $region16: #{temporal_conv_net.5} parent=0 // pred_region
    _
  $region17: #{temporal_conv_net.5} parent=0 // pred_fallthru
    _
  // Predicated region
  $region18: #{temporal_conv_net.5} parent=0 // pred_check
    _
  $region19: #{temporal_conv_net.5} parent=0 // pred_check_branch
    %21 = sbr.rel (0) target = $region21
  $region20: #{temporal_conv_net.5} parent=0 // pred_region
    _
  $region21: #{temporal_conv_net.5} parent=0 // pred_fallthru
    _
  // Predicated region
  $region22: #{temporal_conv_net.5} parent=0 // pred_check
    _
  $region23: #{temporal_conv_net.5} parent=0 // pred_check_branch
    %23 = sbr.rel (0) target = $region25
  $region24: #{temporal_conv_net.5} parent=0 // pred_region
    _
  $region25: #{temporal_conv_net.5} parent=0 // pred_fallthru
    _
  // Predicated region
  $region26: #{temporal_conv_net.5} parent=0 // pred_check
    _
  $region27: #{temporal_conv_net.5} parent=0 // pred_check_branch
    %25 = sbr.rel (0) target = $region29
  $region28: #{temporal_conv_net.5} parent=0 // pred_region
    _
  $region29: #{temporal_conv_net.5} parent=0 // pred_fallthru
    _
  %v27 = vlaneseq
  %v28 = vand.u32 %v27, 127
  %vm29 = vcmp.lt.s32.totalorder %v28, 0
  %v30 = vsub.s32 0, %v28
  %v31 = vsel %vm29, %v30, %v28
  %v32 = vshrl.u32 %v31, 4
  %v33 = vand.u32 %v31, 15
  %v34 = vsub.s32 0, %v33
  %v35 = vsel %vm29, %v34, %v33
  %vm36 = vcmp.ne.s32.totalorder %v35, 0
  %vm37 = vcmp.lt.s32.totalorder %v35, 0
  %vm38 = vmand %vm37, %vm36
  %v39 = vadd.s32 %v35, 16
  %v40 = vsel %vm38, %v39, %v35
  %v41 = vld [vmem:[%s0] sm:$0xf]
  %v42 = vunpack.c.l.bf16 %v41
  %v43 = vld [vmem:[%s1] sm:$0xf]
  %v44 = vld [vmem:[%s1 + $0x4] sm:$0xf]
  %45 = vrot.lane.b32.xlu0 %v42, 4
  %v46 = vpop.permute.xlu0 %45
  %vm47 = vcmp.ge.s32.totalorder %v40, 4
  %v48 = vsel %vm47, 1, 0
  %vm49 = vcmp.eq.s32.totalorder %v48, 1
  %v50 = vsel %vm49, %v46, 0.0
  %v51 = vpack.c.bf16 %v42, %v50
  %v52 = vld [vmem:[%s2] sm:$0xff]
  %v53 = vld [vmem:[%s2 + $0x8] sm:$0xff]
  %55 = vset.pattern.permute.xlu0 0
  %56 = vperm.xlu0 %55, %v52
  %v57 = vpop.permute.xlu0 %56
  %60 = vset.pattern.permute.xlu0 0
  %61 = vperm.xlu0 %60, %v53
  %v62 = vpop.permute.xlu0 %61
  %v66 = vunpack.c.l.b16 %v43
  %v67 = vunpack.c.l.b16 %v44
  %v68 = vpack.c.b16 %v67, %v66
  %vm69 = vcmask 130048
  %v71 = vsel %vm69, %v68, 0
  %73 = vmatprep.subr.bf16.mxu0 0
  %74 = vmatpush1.bf16.msra.mxu0 %v51
  %75 = vmatprep.subr.bf16.mxu0 0
  %76 = vmatpush1.bf16.msra.mxu0 0
  %77 = vmatprep.subr.bf16.mxu0 0
  %78 = vmatpush1.bf16.msra.mxu0 0
  %79 = vmatprep.subr.bf16.mxu0 0
  %80 = vmatpush1.bf16.msra.mxu0 0
  %81 = vmatprep.subr.bf16.mxu0 0
  %82 = vmatpush1.bf16.msra.mxu0 0
  %83 = vmatprep.subr.bf16.mxu0 0
  %84 = vmatpush1.bf16.msra.mxu0 0
  %85 = vmatprep.subr.bf16.mxu0 0
  %86 = vmatpush1.bf16.msra.mxu0 0
  %87 = vmatprep.subr.bf16.mxu0 0
  %88 = vmatpush1.bf16.msra.mxu0 0
  %89 = vmatprep.subr.bf16.mxu0 0
  %90 = vmatpush1.bf16.msra.mxu0 0
  %91 = vmatprep.subr.bf16.mxu0 0
  %92 = vmatpush1.bf16.msra.mxu0 0
  %93 = vmatprep.subr.bf16.mxu0 0
  %94 = vmatpush1.bf16.msra.mxu0 0
  %95 = vmatprep.subr.bf16.mxu0 0
  %96 = vmatpush1.bf16.msra.mxu0 0
  %97 = vmatprep.subr.bf16.mxu0 0
  %98 = vmatpush1.bf16.msra.mxu0 0
  %99 = vmatprep.subr.bf16.mxu0 0
  %100 = vmatpush1.bf16.msra.mxu0 0
  %101 = vmatprep.subr.bf16.mxu0 0
  %102 = vmatpush1.bf16.msra.mxu0 0
  %103 = vmatprep.subr.bf16.mxu0 0
  %104 = vmatpush1.bf16.msra.mxu0 0
  %105 = vmatprep.mubr.bf16.mxu0 0
  %106 = vmatmul.mubr.bf16.gmra.mrb[0].mxu0 %v71
  %v107 = vpop.f32.mrb[0].mxu0
  %v108 = vadd.f32 %v57, %v107
  %v109 = vpop.f32.mrb[0].mxu0
  %v110 = vpop.f32.mrb[0].mxu0
  %v111 = vadd.f32 %v62, %v110
  %v112 = vpop.f32.mrb[0].mxu0
  %113 = vdwg.mxu0
  %v114 = vmax.f32 %v108, 0.0
  %v115 = vmax.f32 %v111, 0.0
  %v116 = vld [vmem:[%s3] sm:$0xf]
  %v117 = vld [vmem:[%s3 + $0x4] sm:$0xf]
  %118 = vrot.lane.b32.xlu0 %v114, 4
  %v119 = vpop.permute.xlu0 %118
  %120 = vrot.lane.b32.xlu0 %v115, 4
  %v121 = vpop.permute.xlu0 %120
  %v122 = vsel %vm49, %v119, 0.0
  %v123 = vsel %vm49, %v121, 0.0
  %v124 = vpack.c.bf16 %v123, %v122
  %v125 = vpack.c.bf16 %v115, %v114
  %v126 = vld [vmem:[%s4] sm:$0xff]
  %v127 = vld [vmem:[%s4 + $0x8] sm:$0xff]
  %129 = vset.pattern.permute.xlu0 0
  %130 = vperm.xlu0 %129, %v126
  %v131 = vpop.permute.xlu0 %130
  %134 = vset.pattern.permute.xlu0 0
  %135 = vperm.xlu0 %134, %v127
  %v136 = vpop.permute.xlu0 %135
  %v140 = vunpack.c.l.b16 %v116
  %v141 = vunpack.c.l.b16 %v117
  %v142 = vpack.c.b16 %v141, %v140
  %vm143 = vcmask 261120
  %v145 = vsel %vm143, %v142, 0
  %147 = vmatprep.subr.bf16.mxu0 0
  %148 = vmatpush1.bf16.msra.mxu0 %v124
  %149 = vmatprep.subr.bf16.mxu0 0
  %150 = vmatpush1.bf16.msra.mxu0 %v125
  %151 = vmatprep.subr.bf16.mxu0 0
  %152 = vmatpush1.bf16.msra.mxu0 0
  %153 = vmatprep.subr.bf16.mxu0 0
  %154 = vmatpush1.bf16.msra.mxu0 0
  %155 = vmatprep.subr.bf16.mxu0 0
  %156 = vmatpush1.bf16.msra.mxu0 0
  %157 = vmatprep.subr.bf16.mxu0 0
  %158 = vmatpush1.bf16.msra.mxu0 0
  %159 = vmatprep.subr.bf16.mxu0 0
  %160 = vmatpush1.bf16.msra.mxu0 0
  %161 = vmatprep.subr.bf16.mxu0 0
  %162 = vmatpush1.bf16.msra.mxu0 0
  %163 = vmatprep.subr.bf16.mxu0 0
  %164 = vmatpush1.bf16.msra.mxu0 0
  %165 = vmatprep.subr.bf16.mxu0 0
  %166 = vmatpush1.bf16.msra.mxu0 0
  %167 = vmatprep.subr.bf16.mxu0 0
  %168 = vmatpush1.bf16.msra.mxu0 0
  %169 = vmatprep.subr.bf16.mxu0 0
  %170 = vmatpush1.bf16.msra.mxu0 0
  %171 = vmatprep.subr.bf16.mxu0 0
  %172 = vmatpush1.bf16.msra.mxu0 0
  %173 = vmatprep.subr.bf16.mxu0 0
  %174 = vmatpush1.bf16.msra.mxu0 0
  %175 = vmatprep.subr.bf16.mxu0 0
  %176 = vmatpush1.bf16.msra.mxu0 0
  %177 = vmatprep.subr.bf16.mxu0 0
  %178 = vmatpush1.bf16.msra.mxu0 0
  %179 = vmatprep.mubr.bf16.mxu0 0
  %180 = vmatmul.mubr.bf16.gmra.mrb[0].mxu0 %v145
  %v181 = vpop.f32.mrb[0].mxu0
  %v182 = vadd.f32 %v131, %v181
  %v183 = vpop.f32.mrb[0].mxu0
  %v184 = vpop.f32.mrb[0].mxu0
  %v185 = vadd.f32 %v136, %v184
  %v186 = vpop.f32.mrb[0].mxu0
  %187 = vdwg.mxu0
  %v188 = vmax.f32 %v182, 0.0
  %v189 = vmax.f32 %v185, 0.0
  %v190 = vld [vmem:[%s5] sm:$0xf]
  %v191 = vld [vmem:[%s5 + $0x4] sm:$0xf]
  %v192 = vld [vmem:[%s6] sm:$0xff]
  %v193 = vld [vmem:[%s6 + $0x8] sm:$0xff]
  %195 = vset.pattern.permute.xlu0 0
  %196 = vperm.xlu0 %195, %v192
  %v197 = vpop.permute.xlu0 %196
  %200 = vset.pattern.permute.xlu0 0
  %201 = vperm.xlu0 %200, %v193
  %v202 = vpop.permute.xlu0 %201
  %v206 = vunpack.c.l.b16 %v190
  %v207 = vunpack.c.l.b16 %v191
  %v208 = vpack.c.b16 %v207, %v206
  %vm209 = vcmask 64512
  %v211 = vsel %vm209, %v208, 0
  %vm213 = vcmask 1043456
  %v215 = vsel %vm213, %v41, 0
  %217 = vmatprep.subr.bf16.mxu0 0
  %218 = vmatpush1.bf16.msra.mxu0 %v215
  %219 = vmatprep.subr.bf16.mxu0 0
  %220 = vmatpush1.bf16.msra.mxu0 0
  %221 = vmatprep.subr.bf16.mxu0 0
  %222 = vmatpush1.bf16.msra.mxu0 0
  %223 = vmatprep.subr.bf16.mxu0 0
  %224 = vmatpush1.bf16.msra.mxu0 0
  %225 = vmatprep.subr.bf16.mxu0 0
  %226 = vmatpush1.bf16.msra.mxu0 0
  %227 = vmatprep.subr.bf16.mxu0 0
  %228 = vmatpush1.bf16.msra.mxu0 0
  %229 = vmatprep.subr.bf16.mxu0 0
  %230 = vmatpush1.bf16.msra.mxu0 0
  %231 = vmatprep.subr.bf16.mxu0 0
  %232 = vmatpush1.bf16.msra.mxu0 0
  %233 = vmatprep.subr.bf16.mxu0 0
  %234 = vmatpush1.bf16.msra.mxu0 0
  %235 = vmatprep.subr.bf16.mxu0 0
  %236 = vmatpush1.bf16.msra.mxu0 0
  %237 = vmatprep.subr.bf16.mxu0 0
  %238 = vmatpush1.bf16.msra.mxu0 0
  %239 = vmatprep.subr.bf16.mxu0 0
  %240 = vmatpush1.bf16.msra.mxu0 0
  %241 = vmatprep.subr.bf16.mxu0 0
  %242 = vmatpush1.bf16.msra.mxu0 0
  %243 = vmatprep.subr.bf16.mxu0 0
  %244 = vmatpush1.bf16.msra.mxu0 0
  %245 = vmatprep.subr.bf16.mxu0 0
  %246 = vmatpush1.bf16.msra.mxu0 0
  %247 = vmatprep.subr.bf16.mxu0 0
  %248 = vmatpush1.bf16.msra.mxu0 0
  %249 = vmatprep.mubr.bf16.mxu0 0
  %250 = vmatmul.mubr.bf16.gmra.mrb[0].mxu0 %v211
  %v251 = vpop.f32.mrb[0].mxu0
  %v252 = vadd.f32 %v197, %v251
  %v253 = vpop.f32.mrb[0].mxu0
  %v254 = vpop.f32.mrb[0].mxu0
  %v255 = vadd.f32 %v202, %v254
  %v256 = vpop.f32.mrb[0].mxu0
  %257 = vdwg.mxu0
  %v258 = vadd.f32 %v188, %v252
  %v259 = vadd.f32 %v189, %v255
  %v260 = vmax.f32 %v258, 0.0
  %v261 = vmax.f32 %v259, 0.0
  %v262 = vpack.c.bf16 %v261, %v260
  %v264 = vunpack.c.l.b16 %v262
  %v265 = vunpack.c.h.b16 %v262
  %v266 = vpack.c.b16 %v264, %v264
  %v267 = vpack.c.b16 %v265, %v265
  %270 = vst [vmem:[%s7] sm:$0xf] %v266
  %271 = vst [vmem:[%s7 + $0x4] sm:$0xf] %v267
  // Predicated region
  $region30: #{temporal_conv_net.5} parent=0 // pred_check
    _
  $region31: #{temporal_conv_net.5} parent=0 // pred_check_branch
    %273 = sbr.rel (0) target = $region33
  $region32: #{temporal_conv_net.5} parent=0 // pred_region
    _
  $region33: #{temporal_conv_net.5} parent=0 // pred_fallthru
    _
  // Predicated region
  $region34: #{temporal_conv_net.5} parent=0 // pred_check
    _
  $region35: #{temporal_conv_net.5} parent=0 // pred_check_branch
    %275 = sbr.rel (0) target = $region37
  $region36: #{temporal_conv_net.5} parent=0 // pred_region
    _
  $region37: #{temporal_conv_net.5} parent=0 // pred_fallthru
    _

</llo_original>
